<compile_context>
chip_gen: v7x
topology: tpu7x:2x2x1
jax: 0.10.0
libtpu: 0.0.40
codegen_flags: <defaults>
</compile_context>

<pallas_src>
import functools

import jax
import jax.numpy as jnp
from jax.experimental import pallas as pl
from jax.experimental.pallas import tpu as pltpu


def _round_up(x, m):
    return ((x + m - 1) // m) * m


def _clustering_head_kernel(x_ref, w1_ref, w2_ref, b_ref, o_ref, *,
                            num_clusters, hidden_pad):
    c_pad = o_ref.shape[-1]
    bias = b_ref[...]                                   # (2, P) f32

    # ---- Linear(embedding_dim, 100) + ReLU  (hidden padded to hidden_pad) ----
    x = x_ref[...].astype(jnp.bfloat16)
    h = jnp.dot(x, w1_ref[...], preferred_element_type=jnp.float32)
    h = h + bias[0:1, :hidden_pad]
    h = jnp.maximum(h, 0.0)

    # ---- Linear(100, num_clusters)  (clusters padded to c_pad) ----
    logits = jnp.dot(h.astype(jnp.bfloat16), w2_ref[...],
                     preferred_element_type=jnp.float32)
    logits = logits + bias[1:2, :c_pad]

    # Padded cluster columns must not contribute to the softmax denominator.
    if num_clusters != c_pad:
        col = jax.lax.broadcasted_iota(jnp.int32, logits.shape, 1)
        logits = jnp.where(col < num_clusters, logits, -jnp.inf)

    # ---- Softmax over the cluster axis (matches nn.Softmax on 2-D input) ----
    m = jnp.max(logits, axis=-1, keepdims=True)
    e = jnp.exp(logits - m)
    s = jnp.sum(e, axis=-1, keepdims=True)
    o_ref[...] = (e * pl.reciprocal(s, approx=False)).astype(o_ref.dtype)


def prepare_params(w1, b1, w2, b2):
    """Pad / pack PyTorch-layout params for the kernel.

    w1: (E, H) f32, b1: (H,) f32, w2: (H, C) f32, b2: (C,) f32
    Returns (w1p bf16 (E, H_pad), w2p bf16 (H_pad, C_pad), bias f32 (2, P)).
    """
    E, H = w1.shape
    C = w2.shape[1]
    H_pad = _round_up(H, 128)
    C_pad = _round_up(C, 128)
    P = max(H_pad, C_pad)
    w1p = jnp.zeros((E, H_pad), jnp.bfloat16).at[:, :H].set(w1.astype(jnp.bfloat16))
    w2p = jnp.zeros((H_pad, C_pad), jnp.bfloat16).at[:H, :C].set(w2.astype(jnp.bfloat16))
    bias = jnp.zeros((2, P), jnp.float32)
    bias = bias.at[0, :H].set(b1.astype(jnp.float32))
    bias = bias.at[1, :C].set(b2.astype(jnp.float32))
    return w1p, w2p, bias


def clustering_head_forward(x, w1p, w2p, bias, num_clusters, *, block_b=None):
    B, E = x.shape
    H_pad = w1p.shape[1]
    C_pad = w2p.shape[1]
    P = bias.shape[1]

    # Batch tile: multiple of 8 sublanes, at most 256 rows (fills the MXU M dim
    # on v6e/v7x without spilling the wide intermediates out of vregs).
    if block_b is None:
        block_b = min(256, _round_up(B, 8))
    block_b = _round_up(block_b, 8)
    B_pad = _round_up(B, block_b)
    if B_pad != B:
        x = jnp.pad(x, ((0, B_pad - B), (0, 0)))
    grid = (B_pad // block_b,)

    kernel = functools.partial(_clustering_head_kernel,
                               num_clusters=num_clusters, hidden_pad=H_pad)

    in_specs = [
        pl.BlockSpec((block_b, E), lambda i: (i, 0)),   # x: batch-tiled
        pl.BlockSpec((E, H_pad), lambda i: (0, 0)),     # weights: resident
        pl.BlockSpec((H_pad, C_pad), lambda i: (0, 0)),
        pl.BlockSpec((2, P), lambda i: (0, 0)),         # packed biases
    ]
    out_specs = pl.BlockSpec((block_b, C_pad), lambda i: (i, 0))
    out_shape = jax.ShapeDtypeStruct((B_pad, C_pad), jnp.float32)

    # VMEM budget from actual buffer sizes (+ headroom), capped well below the
    # 64 MiB-per-TensorCore physical limit on v7x.
    vmem_bytes = (
        2 * block_b * E * 4                        # x tiles (double buffered)
        + 2 * block_b * C_pad * 4                  # out tiles
        + 2 * (E * H_pad + H_pad * C_pad) * 2      # bf16 weights
        + 2 * 8 * P * 4                            # packed biases (sublane-padded)
        + (8 << 20)                                # activation / compiler scratch headroom
    )
    vmem_limit = int(min(max(vmem_bytes, 16 << 20), 48 << 20))

    cost = pl.CostEstimate(
        flops=2 * B_pad * (E * H_pad + H_pad * C_pad),
        transcendentals=B_pad * C_pad,
        bytes_accessed=(B_pad * E * 4 + (E * H_pad + H_pad * C_pad) * 2
                        + 2 * P * 4 + B_pad * C_pad * 4),
    )

    out = pl.pallas_call(
        kernel,
        out_shape=out_shape,
        grid_spec=pltpu.PrefetchScalarGridSpec(
            num_scalar_prefetch=0,
            grid=grid,
            in_specs=in_specs,
            out_specs=out_specs,
        ),
        compiler_params=pltpu.CompilerParams(
            dimension_semantics=("parallel",),
            vmem_limit_bytes=vmem_limit,
        ),
        cost_estimate=cost,
    )(x, w1p, w2p, bias)

    return out[:B, :num_clusters]


def reference_forward(x, w1, b1, w2, b2):
    """Pure-JAX reference mirroring the PyTorch module."""
    h = jnp.maximum(x @ w1 + b1, 0.0)
    logits = h @ w2 + b2
    return jax.nn.softmax(logits, axis=-1)


if __name__ == "__main__":
    embedding_dim = 32
    hidden_dim = 100        # fixed by the module definition
    num_clusters = 10
    batch = 16

    key = jax.random.PRNGKey(0)
    k1, k2, k3, k4, kx = jax.random.split(key, 5)
    # PyTorch nn.Linear-style init: U(-1/sqrt(fan_in), 1/sqrt(fan_in)).
    bound1 = 1.0 / (embedding_dim ** 0.5)
    w1 = jax.random.uniform(k1, (embedding_dim, hidden_dim), jnp.float32, -bound1, bound1)
    b1 = jax.random.uniform(k2, (hidden_dim,), jnp.float32, -bound1, bound1)
    bound2 = 1.0 / (hidden_dim ** 0.5)
    w2 = jax.random.uniform(k3, (hidden_dim, num_clusters), jnp.float32, -bound2, bound2)
    b2 = jax.random.uniform(k4, (num_clusters,), jnp.float32, -bound2, bound2)
    x = jax.random.normal(kx, (batch, embedding_dim), jnp.float32)

    w1p, w2p, bias = prepare_params(w1, b1, w2, b2)
    probs = clustering_head_forward(x, w1p, w2p, bias, num_clusters, block_b=8)
    jax.block_until_ready(probs)

    # Reference uses the same bf16-rounded weights the kernel sees (activations
    # stay f32), so only bf16 activation rounding separates the two paths.
    w1_r = w1.astype(jnp.bfloat16).astype(jnp.float32)
    w2_r = w2.astype(jnp.bfloat16).astype(jnp.float32)
    ref = reference_forward(x, w1_r, b1, w2_r, b2)

    assert probs.shape == (batch, num_clusters)
    assert bool(jnp.allclose(jnp.sum(probs, axis=-1), 1.0, atol=1e-3))
    assert bool(jnp.allclose(probs, ref, atol=2e-2))
    print("KERNEL_OK")
</pallas_src>

<mosaic_0001>
module attributes {stable_mosaic.version = 11 : i64} {
  func.func @_clustering_head_kernel(%arg0: i32, %arg1: memref<8x32xf32, #tpu.memory_space<vmem>>, %arg2: memref<32x128xbf16, #tpu.memory_space<vmem>>, %arg3: memref<128x128xbf16, #tpu.memory_space<vmem>>, %arg4: memref<2x128xf32, #tpu.memory_space<vmem>>, %arg5: memref<8x128xf32, #tpu.memory_space<vmem>>) attributes {dimension_semantics = [#tpu.dimension_semantics<parallel>], iteration_bounds = array<i64: 2>, scalar_prefetch = 0 : i64, scratch_operands = 0 : i64, tpu.core_type = #tpu.core_type<tc>, window_params = [{transform_indices = @transform_0, window_bounds = array<i64: 8, 32>}, {pipeline_mode = #tpu.pipeline_mode<synchronous>, transform_indices = @transform_1, window_bounds = array<i64: 32, 128>}, {pipeline_mode = #tpu.pipeline_mode<synchronous>, transform_indices = @transform_2, window_bounds = array<i64: 128, 128>}, {pipeline_mode = #tpu.pipeline_mode<synchronous>, transform_indices = @transform_3, window_bounds = array<i64: 2, 128>}, {transform_indices = @transform_4, window_bounds = array<i64: 8, 128>}]} {
    %c0 = arith.constant 0 : index
    %c0_0 = arith.constant 0 : index
    %0 = vector.load %arg4[%c0, %c0_0] : memref<2x128xf32, #tpu.memory_space<vmem>>, vector<2x128xf32>
    %c0_1 = arith.constant 0 : index
    %c0_2 = arith.constant 0 : index
    %1 = vector.load %arg1[%c0_1, %c0_2] : memref<8x32xf32, #tpu.memory_space<vmem>>, vector<8x32xf32>
    %2 = arith.truncf %1 : vector<8x32xf32> to vector<8x32xbf16>
    %c0_3 = arith.constant 0 : index
    %c0_4 = arith.constant 0 : index
    %3 = vector.load %arg2[%c0_3, %c0_4] : memref<32x128xbf16, #tpu.memory_space<vmem>>, vector<32x128xbf16>
    %cst = arith.constant dense<0.000000e+00> : vector<8x128xf32>
    %4 = tpu.matmul %2, %3, %cst {dimension_numbers = #tpu.dot_dimension_numbers<[1], [0], [0], [1], [0, 0, 1, 1], [], []>} : vector<8x32xbf16>, vector<32x128xbf16>, vector<8x128xf32> -> vector<8x128xf32>
    %5 = vector.extract_strided_slice %0 {offsets = [0, 0], sizes = [1, 128], strides = [1, 1]} : vector<2x128xf32> to vector<1x128xf32>
    %6 = vector.broadcast %5 : vector<1x128xf32> to vector<8x128xf32>
    %7 = arith.addf %4, %6 : vector<8x128xf32>
    %cst_5 = arith.constant 0.000000e+00 : f32
    %8 = vector.broadcast %cst_5 : f32 to vector<8x128xf32>
    %9 = arith.maximumf %7, %8 : vector<8x128xf32>
    %10 = arith.truncf %9 : vector<8x128xf32> to vector<8x128xbf16>
    %c0_6 = arith.constant 0 : index
    %c0_7 = arith.constant 0 : index
    %11 = vector.load %arg3[%c0_6, %c0_7] : memref<128x128xbf16, #tpu.memory_space<vmem>>, vector<128x128xbf16>
    %cst_8 = arith.constant dense<0.000000e+00> : vector<8x128xf32>
    %12 = tpu.matmul %10, %11, %cst_8 {dimension_numbers = #tpu.dot_dimension_numbers<[1], [0], [0], [1], [0, 0, 1, 1], [], []>} : vector<8x128xbf16>, vector<128x128xbf16>, vector<8x128xf32> -> vector<8x128xf32>
    %13 = vector.extract_strided_slice %0 {offsets = [1, 0], sizes = [1, 128], strides = [1, 1]} : vector<2x128xf32> to vector<1x128xf32>
    %14 = vector.broadcast %13 : vector<1x128xf32> to vector<8x128xf32>
    %15 = arith.addf %12, %14 : vector<8x128xf32>
    %16 = tpu.iota {dimensions = array<i32: 1>} : vector<8x128xi32>
    %c10_i32 = arith.constant 10 : i32
    %17 = vector.broadcast %c10_i32 : i32 to vector<8x128xi32>
    %18 = arith.cmpi slt, %16, %17 : vector<8x128xi32>
    %cst_9 = arith.constant 0xFF800000 : f32
    %19 = vector.broadcast %cst_9 : f32 to vector<8x128xf32>
    %20 = arith.select %18, %15, %19 : vector<8x128xi1>, vector<8x128xf32>
    %cst_10 = arith.constant dense<0xFF800000> : vector<8xf32>
    %21 = vector.multi_reduction <maximumf>, %20, %cst_10 [1] : vector<8x128xf32> to vector<8xf32>
    %22 = vector.shape_cast %21 : vector<8xf32> to vector<8x1xf32>
    %23 = vector.broadcast %22 : vector<8x1xf32> to vector<8x128xf32>
    %24 = arith.subf %20, %23 : vector<8x128xf32>
    %25 = math.exp %24 : vector<8x128xf32>
    %cst_11 = arith.constant dense<0.000000e+00> : vector<8xf32>
    %26 = vector.multi_reduction <add>, %25, %cst_11 [1] : vector<8x128xf32> to vector<8xf32>
    %27 = vector.shape_cast %26 : vector<8xf32> to vector<8x1xf32>
    %28 = tpu.reciprocal %27 : vector<8x1xf32> -> vector<8x1xf32>
    %29 = vector.broadcast %28 : vector<8x1xf32> to vector<8x128xf32>
    %30 = arith.mulf %25, %29 : vector<8x128xf32>
    %c0_12 = arith.constant 0 : index
    %c0_13 = arith.constant 0 : index
    %31 = vector.load %arg5[%c0_12, %c0_13] : memref<8x128xf32, #tpu.memory_space<vmem>>, vector<8x128xf32>
    tpu.vector_store %arg5[%c0_12, %c0_13], %30 {strides = array<i32>} : memref<8x128xf32, #tpu.memory_space<vmem>>, vector<8x128xf32>,
    return
  }
  func.func @transform_0(%arg0: i32) -> (i32, i32) {
    %c0_i32 = arith.constant 0 : i32
    %c0_i32_0 = arith.constant 0 : i32
    return %arg0, %c0_i32 : i32, i32
  }
  func.func @transform_1(%arg0: i32) -> (i32, i32) {
    %c0_i32 = arith.constant 0 : i32
    %c0_i32_0 = arith.constant 0 : i32
    %c0_i32_1 = arith.constant 0 : i32
    return %c0_i32, %c0_i32_0 : i32, i32
  }
  func.func @transform_2(%arg0: i32) -> (i32, i32) {
    %c0_i32 = arith.constant 0 : i32
    %c0_i32_0 = arith.constant 0 : i32
    %c0_i32_1 = arith.constant 0 : i32
    return %c0_i32, %c0_i32_0 : i32, i32
  }
  func.func @transform_3(%arg0: i32) -> (i32, i32) {
    %c0_i32 = arith.constant 0 : i32
    %c0_i32_0 = arith.constant 0 : i32
    %c0_i32_1 = arith.constant 0 : i32
    return %c0_i32, %c0_i32_0 : i32, i32
  }
  func.func @transform_4(%arg0: i32) -> (i32, i32) {
    %c0_i32 = arith.constant 0 : i32
    %c0_i32_0 = arith.constant 0 : i32
    return %arg0, %c0_i32 : i32, i32
  }
}

</mosaic_0001>

<llo_original>
// kernel: tpu_custom_call.1
$region0: #{tpu_custom_call.1}
  #allocation0 [shape = 'u32[]', space=smem, size = 0x4, offset = 0x4, fixed_abs, tag = 'smem constant byte address 0x4 - core index']
  #allocation1 [shape = 'u32[144,128]{1,0:T(1,128)}', space=vmem, size = 0x12000, scoped, tag = 'internal scratch']
  %s0 = inlined_call_operand.hbm [shape: f32[16,32], index: 0, kind: input, shape index: {}]
  %s1 = inlined_call_operand.hbm [shape: bf16[32,128], index: 1, kind: input, shape index: {}]
  %s2 = inlined_call_operand.hbm [shape: bf16[128,128], index: 2, kind: input, shape index: {}]
  %s3 = inlined_call_operand.vmem [shape: f32[2,128], index: 3, kind: input, shape index: {}]
  %s4 = inlined_call_operand.hbm [shape: f32[16,128], index: 4, kind: output, shape index: {}]
  %s5 = sld [smem:[#allocation0]]
  $region61: #{tpu_custom_call.1} parent=0
    _
  %s7 = ssub.s32 1, %s5
  %s8 = scalar_select 0, %s7, %s5
  $region1: #{tpu_custom_call.1} parent=0
    #allocation2 [shape = 'u8[8192]{0}', space=vmem, size = 0x2000, scoped, tag = 'input window, operand 0']
    #allocation3 [shape = 's32[2]{0}', space=sflag, size = 0x8, scoped, tag = 'scoped memory for tpu_custom_call.1']
    #allocation4 [shape = 's32[2]{0}', space=sflag, size = 0x8, scoped, tag = 'scoped memory for tpu_custom_call.1']
    #allocation5 [shape = 'u8[8192]{0}', space=vmem, size = 0x2000, scoped, tag = 'input window, operand 1, single buffered']
    #allocation6 [shape = 's32[1]{0}', space=sflag, size = 0x4, scoped, tag = 'scoped memory for tpu_custom_call.1']
    #allocation7 [shape = 'u8[32768]{0}', space=vmem, size = 0x8000, scoped, tag = 'input window, operand 2, single buffered']
    #allocation8 [shape = 'u8[8192]{0}', space=vmem, size = 0x2000, scoped, tag = 'output window, operand 0']
    %9 = vsyncpa [#allocation3], 0
    %s10 = scalar_lea.sflag [#allocation3], 1
    %11 = vsyncpa %s10, 0
    %12 = vsyncpa [#allocation6], 0
    %13 = vsyncpa [#allocation4], 0
    %s14 = scalar_lea.sflag [#allocation4], 1
    %15 = vsyncpa %s14, 0
    loop: start=0, step=1, limit=4
    $region2: #{tpu_custom_call.1} parent=1 // loop_pre_header
      _
    $region3: #{tpu_custom_call.1} parent=1 // loop_header
      %s17 = sphi 0, %s21
      %p18 = scmp.ge.s32.totalorder %s17, 4
      %s27 = sphi 0, %s29
      %s30 = sphi 0, %s27
      %s31 = sphi 0, %s30
      %s47 = sphi 0, %s31
      %s51 = sphi 0, %s51
      %s53 = sphi 0, %s51
      %s54 = sphi 0, %s53
      %s68 = sphi 0, %s54
      %s72 = sphi 0, %s72
      %s74 = sphi 0, %s72
      %s75 = sphi 0, %s74
      %s89 = sphi 0, %s75
      %s93 = sphi 0, %s93
      %s95 = sphi 0, %s93
      %s96 = sphi 0, %s95
      %s110 = sphi 0, %s96
      %s116 = sphi 0, %s118
      %s119 = sphi 0, %s116
      %s120 = sphi 0, %s119
      %s136 = sphi 0, %s120
    $region4: #{tpu_custom_call.1} parent=1 // loop_header_branch
      %20 = sbr.rel (%p18) target = $region8
    $region5: #{tpu_custom_call.1} parent=1 // loop_body
      %s22 = ssub.s32 %s17, 1
      %s23 = ssub.s32 %s17, 2
      %s24 = sadd.s32 %s17, 1
      %s25 = ssub.s32 %s17, %s24
      %p26 = scmp.eq.s32.totalorder %s25, 0
      %s28 = sadd.s32 %s27, 1
      %s29 = scalar_select %p26, %s27, %s28
      %p32 = pneg %p26
      %p33 = scmp.eq.s32.totalorder %s17, 1
      %p34 = por %p32, %p33
      %p35 = scmp.ne.s32.totalorder %s27, %s30
      %p36 = scmp.eq.s32.totalorder %s17, 0
      %p37 = por %p35, %p36
      %p38 = scmp.ne.s32.totalorder %s27, %s30
      %p39 = scmp.eq.s32.totalorder %s22, 1
      %p40 = por %p38, %p39
      %p41 = scmp.ne.s32.totalorder %s30, %s31
      %p42 = scmp.eq.s32.totalorder %s22, 0
      %p43 = por %p41, %p42
      %p44 = scmp.ne.s32.totalorder %s30, %s31
      %p45 = scmp.eq.s32.totalorder %s23, 1
      %p46 = por %p44, %p45
      %p48 = scmp.ne.s32.totalorder %s31, %s47
      %p49 = scmp.eq.s32.totalorder %s23, 0
      %p50 = por %p48, %p49
      %s52 = sadd.s32 %s51, 1
      %p55 = scmp.eq.s32.totalorder %s17, 1
      %p56 = scmp.ne.s32.totalorder %s51, %s53
      %p57 = scmp.eq.s32.totalorder %s17, 0
      %p58 = por %p56, %p57
      %p59 = scmp.ne.s32.totalorder %s51, %s53
      %p60 = scmp.eq.s32.totalorder %s22, 1
      %p61 = por %p59, %p60
      %p62 = scmp.ne.s32.totalorder %s53, %s54
      %p63 = scmp.eq.s32.totalorder %s22, 0
      %p64 = por %p62, %p63
      %p65 = scmp.ne.s32.totalorder %s53, %s54
      %p66 = scmp.eq.s32.totalorder %s23, 1
      %p67 = por %p65, %p66
      %p69 = scmp.ne.s32.totalorder %s54, %s68
      %p70 = scmp.eq.s32.totalorder %s23, 0
      %p71 = por %p69, %p70
      %s73 = sadd.s32 %s72, 1
      %p76 = scmp.eq.s32.totalorder %s17, 1
      %p77 = scmp.ne.s32.totalorder %s72, %s74
      %p78 = scmp.eq.s32.totalorder %s17, 0
      %p79 = por %p77, %p78
      %p80 = scmp.ne.s32.totalorder %s72, %s74
      %p81 = scmp.eq.s32.totalorder %s22, 1
      %p82 = por %p80, %p81
      %p83 = scmp.ne.s32.totalorder %s74, %s75
      %p84 = scmp.eq.s32.totalorder %s22, 0
      %p85 = por %p83, %p84
      %p86 = scmp.ne.s32.totalorder %s74, %s75
      %p87 = scmp.eq.s32.totalorder %s23, 1
      %p88 = por %p86, %p87
      %p90 = scmp.ne.s32.totalorder %s75, %s89
      %p91 = scmp.eq.s32.totalorder %s23, 0
      %p92 = por %p90, %p91
      %s94 = sadd.s32 %s93, 1
      %p97 = scmp.eq.s32.totalorder %s17, 1
      %p98 = scmp.ne.s32.totalorder %s93, %s95
      %p99 = scmp.eq.s32.totalorder %s17, 0
      %p100 = por %p98, %p99
      %p101 = scmp.ne.s32.totalorder %s93, %s95
      %p102 = scmp.eq.s32.totalorder %s22, 1
      %p103 = por %p101, %p102
      %p104 = scmp.ne.s32.totalorder %s95, %s96
      %p105 = scmp.eq.s32.totalorder %s22, 0
      %p106 = por %p104, %p105
      %p107 = scmp.ne.s32.totalorder %s95, %s96
      %p108 = scmp.eq.s32.totalorder %s23, 1
      %p109 = por %p107, %p108
      %p111 = scmp.ne.s32.totalorder %s96, %s110
      %p112 = scmp.eq.s32.totalorder %s23, 0
      %p113 = por %p111, %p112
      %s114 = ssub.s32 %s17, %s24
      %p115 = scmp.eq.s32.totalorder %s114, 0
      %s117 = sadd.s32 %s116, 1
      %s118 = scalar_select %p115, %s116, %s117
      %p121 = pneg %p115
      %p122 = scmp.eq.s32.totalorder %s17, 1
      %p123 = por %p121, %p122
      %p124 = scmp.ne.s32.totalorder %s116, %s119
      %p125 = scmp.eq.s32.totalorder %s17, 0
      %p126 = por %p124, %p125
      %p127 = scmp.ne.s32.totalorder %s116, %s119
      %p128 = scmp.eq.s32.totalorder %s22, 1
      %p129 = por %p127, %p128
      %p130 = scmp.ne.s32.totalorder %s119, %s120
      %p131 = scmp.eq.s32.totalorder %s22, 0
      %p132 = por %p130, %p131
      %p133 = scmp.ne.s32.totalorder %s119, %s120
      %p134 = scmp.eq.s32.totalorder %s23, 1
      %p135 = por %p133, %p134
      %p137 = scmp.ne.s32.totalorder %s120, %s136
      %p138 = scmp.eq.s32.totalorder %s23, 0
      %p139 = por %p137, %p138
      %p140 = scmp.le.s32.totalorder 1, %s17
      %p141 = scmp.lt.s32.totalorder %s17, 3
      %p142 = pnand %p140, %p141
      %p143 = pneg %p142
      // Predicated region
      $region9: #{tpu_custom_call.1} parent=5 // pred_check
        _
      $region10: #{tpu_custom_call.1} parent=5 // pred_check_branch
        %145 = sbr.rel (%p142) target = $region12
      $region11: #{tpu_custom_call.1} parent=5 // pred_region
        %s146 = ssub.s32 %s17, 1
        // Predicated region
        $region13: #{tpu_custom_call.1} parent=11 // pred_check
          %p147 = pneg %p64
        $region14: #{tpu_custom_call.1} parent=11 // pred_check_branch
          %149 = sbr.rel (%p147) target = $region16
        $region15: #{tpu_custom_call.1} parent=11 // pred_region
          %s151 = ssub.s32 256, 256
          %152 = vsyncadd [#allocation6], %s151
          %s153 = sshll.u32 [#allocation5], 4
          %s154 = int_to_ptr.vmem [resolvable:$true] %s153
          %159 = dma.hbm_to_vmem [thread:$0]  %s1, 256, %s154, [#allocation6], 64, 64, 4
        $region16: #{tpu_custom_call.1} parent=11 // pred_fallthru
          _
        // Predicated region
        $region17: #{tpu_custom_call.1} parent=11 // pred_check
          %p160 = pneg %p85
        $region18: #{tpu_custom_call.1} parent=11 // pred_check_branch
          %162 = sbr.rel (%p160) target = $region20
        $region19: #{tpu_custom_call.1} parent=11 // pred_region
          %s164 = ssub.s32 1024, 1024
          %165 = vsyncadd [#allocation6], %s164
          %s166 = sshll.u32 [#allocation7], 4
          %s167 = int_to_ptr.vmem [resolvable:$true] %s166
          %172 = dma.hbm_to_vmem [thread:$0]  %s2, 1024, %s167, [#allocation6], 64, 64, 4
        $region20: #{tpu_custom_call.1} parent=11 // pred_fallthru
          _
        // Predicated region
        $region21: #{tpu_custom_call.1} parent=11 // pred_check
          %p173 = pneg %p106
        $region22: #{tpu_custom_call.1} parent=11 // pred_check_branch
          %175 = sbr.rel (%p173) target = $region24
        $region23: #{tpu_custom_call.1} parent=11 // pred_region
          _
        $region24: #{tpu_custom_call.1} parent=11 // pred_fallthru
          _
      $region12: #{tpu_custom_call.1} parent=5 // pred_fallthru
        _
      %p176 = scmp.lt.s32.totalorder %s17, 2
      // Predicated region
      $region25: #{tpu_custom_call.1} parent=5 // pred_check
        %p177 = pneg %p176
      $region26: #{tpu_custom_call.1} parent=5 // pred_check_branch
        %179 = sbr.rel (%p177) target = $region28
      $region27: #{tpu_custom_call.1} parent=5 // pred_region
        // Predicated region
        $region29: #{tpu_custom_call.1} parent=27 // pred_check
          %p180 = pneg %p37
        $region30: #{tpu_custom_call.1} parent=27 // pred_check_branch
          %182 = sbr.rel (%p180) target = $region32
        $region31: #{tpu_custom_call.1} parent=27 // pred_region
          %s183 = sand.u32 %s27, 1
          %s184 = scalar_lea.sflag [#allocation3], %s183
          %s185 = sand.u32 %s27, 1
          %s186 = smul.addr %s185, 8
          %s187 = scalar_lea.vmem [#allocation2], %s186
          %s189 = ssub.s32 128, 128
          %190 = vsyncadd %s184, %s189
          %s191 = smul.addr %s17, 128
          %s192 = scalar_lea.hbm %s0, %s191
          %s194 = sshll.u32 %s187, 4
          %s195 = int_to_ptr.vmem [resolvable:$true] %s194
          %197 = dma.hbm_to_vmem [thread:$0]  %s192, 128, %s195, %s184
        $region32: #{tpu_custom_call.1} parent=27 // pred_fallthru
          _
      $region28: #{tpu_custom_call.1} parent=5 // pred_fallthru
        _
      %p198 = scmp.le.s32.totalorder 1, %s17
      %p199 = scmp.lt.s32.totalorder %s17, 3
      %p200 = pnand %p198, %p199
      %p201 = pneg %p200
      // Predicated region
      $region33: #{tpu_custom_call.1} parent=5 // pred_check
        _
      $region34: #{tpu_custom_call.1} parent=5 // pred_check_branch
        %203 = sbr.rel (%p200) target = $region36
      $region35: #{tpu_custom_call.1} parent=5 // pred_region
        %s204 = ssub.s32 %s17, 1
        %s205 = sand.u32 %s30, 1
        %s206 = scalar_lea.sflag [#allocation3], %s205
        %s207 = sand.u32 %s30, 1
        %s208 = smul.addr %s207, 8
        %s209 = scalar_lea.vmem [#allocation2], %s208
        // Predicated region
        $region37: #{tpu_custom_call.1} parent=35 // pred_check
          %p210 = pneg %p43
        $region38: #{tpu_custom_call.1} parent=35 // pred_check_branch
          %212 = sbr.rel (%p210) target = $region40
        $region39: #{tpu_custom_call.1} parent=35 // pred_region
          %213 = dma.done %s206, 128
        $region40: #{tpu_custom_call.1} parent=35 // pred_fallthru
          _
        // Predicated region
        $region41: #{tpu_custom_call.1} parent=35 // pred_check
          %p214 = pneg %p64
        $region42: #{tpu_custom_call.1} parent=35 // pred_check_branch
          %216 = sbr.rel (%p214) target = $region44
        $region43: #{tpu_custom_call.1} parent=35 // pred_region
          %217 = dma.done [#allocation6], 256
        $region44: #{tpu_custom_call.1} parent=35 // pred_fallthru
          _
        // Predicated region
        $region45: #{tpu_custom_call.1} parent=35 // pred_check
          %p218 = pneg %p85
        $region46: #{tpu_custom_call.1} parent=35 // pred_check_branch
          %220 = sbr.rel (%p218) target = $region48
        $region47: #{tpu_custom_call.1} parent=35 // pred_region
          %221 = dma.done [#allocation6], 1024
        $region48: #{tpu_custom_call.1} parent=35 // pred_fallthru
          _
        %s222 = sand.u32 %s30, 1
        %s223 = scalar_lea.sflag [#allocation3], %s222
        %s224 = sand.u32 %s30, 1
        %s225 = smul.addr %s224, 8
        %s226 = scalar_lea.vmem [#allocation2], %s225
        %p227 = pneg %p43
        %p228 = pneg %p40
        %p229 = pneg %p64
        %p230 = pneg %p61
        %p231 = pneg %p85
        %p232 = pneg %p82
        %p233 = pneg %p106
        %p234 = pneg %p103
        %p235 = pneg %p132
        %p236 = pneg %p129
        %s237 = sand.u32 %s119, 1
        %s238 = scalar_lea.sflag [#allocation4], %s237
        %s239 = sand.u32 %s119, 1
        %s240 = smul.addr %s239, 8
        %s241 = scalar_lea.vmem [#allocation8], %s240
        %v243 = vld [vmem:[%s3] sm:$0x3]
        %v244 = vld [vmem:[%s209] sm:$0xff]
        %v245 = vpack.c.bf16 %v244, %v244
        %v246 = vld [vmem:[#allocation5] sm:$0xf]
        %v247 = vld [vmem:[#allocation5 + $0x4] sm:$0xf]
        %v248 = vld [vmem:[#allocation5 + $0x8] sm:$0xf]
        %v249 = vld [vmem:[#allocation5 + $0xc] sm:$0xf]
        %v250 = vlaneseq
        %v251 = vshrl.u32 %v250, 7
        %v252 = vsub.s32 0, %v251
        %v253 = vrot.slane %v243, %v252
        %v258 = vunpack.c.l.b16 %v246
        %v259 = vunpack.c.l.b16 %v247
        %v260 = vunpack.c.l.b16 %v248
        %v261 = vunpack.c.l.b16 %v249
        %v262 = vpack.c.b16 %v259, %v258
        %v263 = vpack.c.b16 %v261, %v260
        %vm266 = vcmask 261120
        %v268 = vsel %vm266, %v245, 0
        %270 = vmatprep.subr.bf16.mxu0 0
        %271 = vmatpush1.bf16.msra.mxu0 %v262
        %272 = vmatprep.subr.bf16.mxu0 0
        %273 = vmatpush1.bf16.msra.mxu0 %v263
        %274 = vmatprep.subr.bf16.mxu0 0
        %275 = vmatpush1.bf16.msra.mxu0 0
        %276 = vmatprep.subr.bf16.mxu0 0
        %277 = vmatpush1.bf16.msra.mxu0 0
        %278 = vmatprep.subr.bf16.mxu0 0
        %279 = vmatpush1.bf16.msra.mxu0 0
        %280 = vmatprep.subr.bf16.mxu0 0
        %281 = vmatpush1.bf16.msra.mxu0 0
        %282 = vmatprep.subr.bf16.mxu0 0
        %283 = vmatpush1.bf16.msra.mxu0 0
        %284 = vmatprep.subr.bf16.mxu0 0
        %285 = vmatpush1.bf16.msra.mxu0 0
        %286 = vmatprep.subr.bf16.mxu0 0
        %287 = vmatpush1.bf16.msra.mxu0 0
        %288 = vmatprep.subr.bf16.mxu0 0
        %289 = vmatpush1.bf16.msra.mxu0 0
        %290 = vmatprep.subr.bf16.mxu0 0
        %291 = vmatpush1.bf16.msra.mxu0 0
        %292 = vmatprep.subr.bf16.mxu0 0
        %293 = vmatpush1.bf16.msra.mxu0 0
        %294 = vmatprep.subr.bf16.mxu0 0
        %295 = vmatpush1.bf16.msra.mxu0 0
        %296 = vmatprep.subr.bf16.mxu0 0
        %297 = vmatpush1.bf16.msra.mxu0 0
        %298 = vmatprep.subr.bf16.mxu0 0
        %299 = vmatpush1.bf16.msra.mxu0 0
        %300 = vmatprep.subr.bf16.mxu0 0
        %301 = vmatpush1.bf16.msra.mxu0 0
        %302 = vmatprep.mubr.bf16.mxu0 0
        %303 = vmatmul.mubr.bf16.gmra.mrb[0].mxu0 %v268
        %v304 = vpop.f32.mrb[0].mxu0
        %v305 = vadd.f32 %v253, %v304
        %v306 = vpop.f32.mrb[0].mxu0
        %v307 = vpop.f32.mrb[0].mxu0
        %v308 = vpop.f32.mrb[0].mxu0
        %309 = vdwg.mxu0
        %v310 = vmax.f32 %v305, 0.0
        %v311 = vpack.c.bf16 %v310, %v310
        %v312 = vld [vmem:[#allocation7] sm:$0xf]
        %v313 = vld [vmem:[#allocation7 + $0x4] sm:$0xf]
        %v314 = vld [vmem:[#allocation7 + $0x8] sm:$0xf]
        %v315 = vld [vmem:[#allocation7 + $0xc] sm:$0xf]
        %v316 = vld [vmem:[#allocation7 + $0x10] sm:$0xf]
        %v317 = vld [vmem:[#allocation7 + $0x14] sm:$0xf]
        %v318 = vld [vmem:[#allocation7 + $0x18] sm:$0xf]
        %v319 = vld [vmem:[#allocation7 + $0x1c] sm:$0xf]
        %v320 = vld [vmem:[#allocation7 + $0x20] sm:$0xf]
        %v321 = vld [vmem:[#allocation7 + $0x24] sm:$0xf]
        %v322 = vld [vmem:[#allocation7 + $0x28] sm:$0xf]
        %v323 = vld [vmem:[#allocation7 + $0x2c] sm:$0xf]
        %v324 = vld [vmem:[#allocation7 + $0x30] sm:$0xf]
        %v325 = vld [vmem:[#allocation7 + $0x34] sm:$0xf]
        %v326 = vld [vmem:[#allocation7 + $0x38] sm:$0xf]
        %v327 = vld [vmem:[#allocation7 + $0x3c] sm:$0xf]
        %v328 = vlaneseq
        %v329 = vshrl.u32 %v328, 7
        %v330 = vsub.s32 1, %v329
        %v331 = vrot.slane %v243, %v330
        %v348 = vunpack.c.l.b16 %v312
        %v349 = vunpack.c.l.b16 %v313
        %v350 = vunpack.c.l.b16 %v314
        %v351 = vunpack.c.l.b16 %v315
        %v352 = vunpack.c.l.b16 %v316
        %v353 = vunpack.c.l.b16 %v317
        %v354 = vunpack.c.l.b16 %v318
        %v355 = vunpack.c.l.b16 %v319
        %v356 = vunpack.c.l.b16 %v320
        %v357 = vunpack.c.l.b16 %v321
        %v358 = vunpack.c.l.b16 %v322
        %v359 = vunpack.c.l.b16 %v323
        %v360 = vunpack.c.l.b16 %v324
        %v361 = vunpack.c.l.b16 %v325
        %v362 = vunpack.c.l.b16 %v326
        %v363 = vunpack.c.l.b16 %v327
        %v364 = vpack.c.b16 %v349, %v348
        %v365 = vpack.c.b16 %v351, %v350
        %v366 = vpack.c.b16 %v353, %v352
        %v367 = vpack.c.b16 %v355, %v354
        %v368 = vpack.c.b16 %v357, %v356
        %v369 = vpack.c.b16 %v359, %v358
        %v370 = vpack.c.b16 %v361, %v360
        %v371 = vpack.c.b16 %v363, %v362
        %380 = vmatprep.subr.bf16.mxu0 0
        %381 = vmatpush1.bf16.msra.mxu0 %v364
        %382 = vmatprep.subr.bf16.mxu0 0
        %383 = vmatpush1.bf16.msra.mxu0 %v365
        %384 = vmatprep.subr.bf16.mxu0 0
        %385 = vmatpush1.bf16.msra.mxu0 %v366
        %386 = vmatprep.subr.bf16.mxu0 0
        %387 = vmatpush1.bf16.msra.mxu0 %v367
        %388 = vmatprep.subr.bf16.mxu0 0
        %389 = vmatpush1.bf16.msra.mxu0 %v368
        %390 = vmatprep.subr.bf16.mxu0 0
        %391 = vmatpush1.bf16.msra.mxu0 %v369
        %392 = vmatprep.subr.bf16.mxu0 0
        %393 = vmatpush1.bf16.msra.mxu0 %v370
        %394 = vmatprep.subr.bf16.mxu0 0
        %395 = vmatpush1.bf16.msra.mxu0 %v371
        %396 = vmatprep.subr.bf16.mxu0 0
        %397 = vmatpush1.bf16.msra.mxu0 0
        %398 = vmatprep.subr.bf16.mxu0 0
        %399 = vmatpush1.bf16.msra.mxu0 0
        %400 = vmatprep.subr.bf16.mxu0 0
        %401 = vmatpush1.bf16.msra.mxu0 0
        %402 = vmatprep.subr.bf16.mxu0 0
        %403 = vmatpush1.bf16.msra.mxu0 0
        %404 = vmatprep.subr.bf16.mxu0 0
        %405 = vmatpush1.bf16.msra.mxu0 0
        %406 = vmatprep.subr.bf16.mxu0 0
        %407 = vmatpush1.bf16.msra.mxu0 0
        %408 = vmatprep.subr.bf16.mxu0 0
        %409 = vmatpush1.bf16.msra.mxu0 0
        %410 = vmatprep.subr.bf16.mxu0 0
        %411 = vmatpush1.bf16.msra.mxu0 0
        %412 = vmatprep.mubr.bf16.mxu0 0
        %413 = vmatmul.mubr.bf16.gmra.mrb[0].mxu0 %v311
        %v414 = vpop.f32.mrb[0].mxu0
        %v415 = vadd.f32 %v331, %v414
        %v416 = vpop.f32.mrb[0].mxu0
        %v417 = vpop.f32.mrb[0].mxu0
        %v418 = vpop.f32.mrb[0].mxu0
        %419 = vdwg.mxu0
        %v420 = vlaneseq
        %v421 = vand.u32 %v420, 127
        %vm422 = vcmp.lt.s32.totalorder %v421, 10
        %v423 = vsel %vm422, %v415, -inf
        %424 = vmax.xlane.f32.xlu0 %v423
        %v425 = vpop.xlane.xlu0 %424
        %v426 = vsub.f32 %v423, %v425
        %v427 = vmul.f32 %v426, 1.442695
        %v428 = vpow.pop %v427
        %429 = vadd.xlane.f32.xlu0 %v428
        %v430 = vpop.xlane.xlu0 %429
        %v431 = vrcp.pop %v430
        %v432 = vmul.f32 %v428, %v431
        %433 = vst [vmem:[%s241] sm:$0xff] %v432
        %s434 = sand.u32 %s119, 1
        %s435 = scalar_lea.sflag [#allocation4], %s434
        %s436 = sand.u32 %s119, 1
        %s437 = smul.addr %s436, 8
        %s438 = scalar_lea.vmem [#allocation8], %s437
        // Predicated region
        $region49: #{tpu_custom_call.1} parent=35 // pred_check
          %p439 = pneg %p129
        $region50: #{tpu_custom_call.1} parent=35 // pred_check_branch
          %441 = sbr.rel (%p439) target = $region52
        $region51: #{tpu_custom_call.1} parent=35 // pred_region
          %s443 = ssub.s32 128, 128
          %444 = vsyncadd %s435, %s443
          %s445 = smul.addr %s22, 128
          %s446 = scalar_lea.hbm %s4, %s445
          %s448 = sshll.u32 %s438, 4
          %s449 = int_to_ptr.vmem [resolvable:$true] %s448
          %451 = dma.vmem_to_hbm [thread:$0]  %s449, 128, %s446, %s435
        $region52: #{tpu_custom_call.1} parent=35 // pred_fallthru
          _
      $region36: #{tpu_custom_call.1} parent=5 // pred_fallthru
        _
      %p452 = scmp.le.s32.totalorder 2, %s17
      // Predicated region
      $region53: #{tpu_custom_call.1} parent=5 // pred_check
        %p453 = pneg %p452
      $region54: #{tpu_custom_call.1} parent=5 // pred_check_branch
        %455 = sbr.rel (%p453) target = $region56
      $region55: #{tpu_custom_call.1} parent=5 // pred_region
        %s456 = ssub.s32 %s17, 2
        // Predicated region
        $region57: #{tpu_custom_call.1} parent=55 // pred_check
          %p457 = pneg %p135
        $region58: #{tpu_custom_call.1} parent=55 // pred_check_branch
          %459 = sbr.rel (%p457) target = $region60
        $region59: #{tpu_custom_call.1} parent=55 // pred_region
          %s460 = sand.u32 %s120, 1
          %s461 = scalar_lea.sflag [#allocation4], %s460
          %s462 = sand.u32 %s120, 1
          %s463 = smul.addr %s462, 8
          %s464 = scalar_lea.vmem [#allocation8], %s463
          %465 = dma.done %s461, 128
        $region60: #{tpu_custom_call.1} parent=55 // pred_fallthru
          _
      $region56: #{tpu_custom_call.1} parent=5 // pred_fallthru
        _
    $region6: #{tpu_custom_call.1} parent=1 // loop_footer
      %s21 = sadd.s32 1, %s17
    $region7: #{tpu_custom_call.1} parent=1 // loop_footer_branch
      %16 = sbr.rel target = $region3
    $region8: #{tpu_custom_call.1} parent=1 // loop_exit
      _
    %466 = vsyncpa [#allocation3], 1
    %s467 = scalar_lea.sflag [#allocation3], 1
    %468 = vsyncpa %s467, 1
    %469 = vsyncpa [#allocation6], 1
    %470 = vsyncpa [#allocation4], 1
    %s471 = scalar_lea.sflag [#allocation4], 1
    %472 = vsyncpa %s471, 1

</llo_original>
